<compile_context>
chip_gen: v6e
topology: v6e:2x2x1
jax: 0.10.0
libtpu: 0.0.40
codegen_flags: <defaults>
</compile_context>

<pallas_src>
import functools

import numpy as np
import jax
import jax.numpy as jnp
from jax.experimental import pallas as pl
from jax.experimental.pallas import tpu as pltpu


def _round_up(n, m):
    return ((n + m - 1) // m) * m


def _padded_tile_bytes(rows, cols, itemsize=4):
    # VMEM stores (8, 128) tiles: account for sublane/lane padding of a block.
    return _round_up(max(rows, 1), 8) * _round_up(max(cols, 1), 128) * itemsize


_MXU_MIN_V = 32                      # below this depth an exact f32 VPU FMA chain is cheaper
_VMEM_TILE_BUDGET = 28 * 1024 * 1024  # per-step working-set target (safe on v7x 64 MiB/TC)


def _objective_kernel(x_ref, coeff_ref, bias_ref, out_ref, *, use_mxu):
    # x_ref    : (tb, V)   f32       batch tile of input-variable values
    # coeff_ref: (V, tk)   f32       input-variable mixing coefficients (lane-dense tile)
    # bias_ref : (1, tk)   f32       precomputed weight-variable contribution
    # out_ref  : (tb, tk)  f32/bf16  vectorized objective values
    x = x_ref[...]
    c = coeff_ref[...]
    if use_mxu:
        # Deep contraction: MXU with f32 accumulation.
        ang = jnp.dot(x, c, preferred_element_type=jnp.float32)
    else:
        # Typical case: only a handful of circuit input variables. An unrolled
        # VPU FMA chain is exact f32 and avoids a nearly-empty MXU pass.
        ang = jnp.zeros((x.shape[0], c.shape[1]), jnp.float32)
        for v in range(x.shape[1]):          # V is static (block shape), fully unrolled
            ang = ang + x[:, v:v + 1] * c[v:v + 1, :]
    out_ref[...] = jnp.cos(ang + bias_ref[...]).astype(out_ref.dtype)


def _choose_tiles(B, V, Kp, max_tb, max_tk):
    # K tile: lane-dense (multiple of 128), capped so the double-buffered output
    # tile stays modest even for very large n_outputs.
    tk = min(Kp, max_tk)
    # Batch tile: as large as the VMEM budget allows (amortizes the ~0.35us fixed
    # per-grid-step pipeline overhead), capped by max_tb and the batch itself.
    v_lanes = _round_up(max(V, 1), 128)                    # x rows are lane-padded anyway
    per_row = 2 * 4 * (v_lanes + tk)                       # double-buffered x + out, f32
    tb = _VMEM_TILE_BUDGET // per_row
    tb = min(tb, max_tb, _round_up(B, 8))
    tb = max(8, (tb // 8) * 8)
    return tb, tk


def _vmem_limit_bytes(tb, tk, V, out_itemsize):
    tile = (2 * _padded_tile_bytes(tb, V)
            + 2 * _padded_tile_bytes(V, tk)
            + 2 * _padded_tile_bytes(1, tk)
            + 2 * _padded_tile_bytes(tb, tk, out_itemsize))
    # ~30% headroom for compiler-internal scratch/semaphores; clamp to a range
    # that is safe on v7x (64 MiB/TC) while still usable on v5e/v6e (128 MiB).
    return int(min(max(tile * 1.3, 16 * 1024 * 1024), 48 * 1024 * 1024))


@functools.partial(jax.jit,
                   static_argnames=("n_outputs", "max_tb", "max_tk", "out_dtype"))
def tequila_objective_pallas(x, coeff_pad, bias_pad, *, n_outputs,
                             max_tb=8192, max_tk=1024, out_dtype=jnp.float32):
    """Batched evaluation of the (stand-in) vectorized objective.

    x        : (B, V)  float inputs
    coeff_pad: (V, Kp) f32, Kp % 128 == 0, columns >= n_outputs are zero
    bias_pad : (1, Kp) f32 weight-variable contribution to each output angle
    returns  : (B, n_outputs) f32
    """
    x = x.astype(jnp.float32)
    B, V = x.shape
    Vc, Kp = coeff_pad.shape
    assert V == Vc and bias_pad.shape == (1, Kp) and Kp % 128 == 0

    tb, tk = _choose_tiles(B, V, Kp, max_tb, max_tk)
    grid = (pl.cdiv(B, tb), pl.cdiv(Kp, tk))      # partial edge blocks are masked by Pallas

    out_itemsize = jnp.dtype(out_dtype).itemsize
    cost = pl.CostEstimate(
        flops=2 * B * V * Kp,
        transcendentals=B * Kp,
        bytes_accessed=int(x.size * 4 + coeff_pad.size * 4 + bias_pad.size * 4
                           + B * Kp * out_itemsize),
    )

    kernel = functools.partial(_objective_kernel, use_mxu=V >= _MXU_MIN_V)

    out = pl.pallas_call(
        kernel,
        out_shape=jax.ShapeDtypeStruct((B, Kp), out_dtype),
        grid_spec=pltpu.PrefetchScalarGridSpec(
            num_scalar_prefetch=0,
            grid=grid,
            in_specs=[pl.BlockSpec((tb, V), lambda i, j: (i, 0)),    # batch tile
                      pl.BlockSpec((V, tk), lambda i, j: (0, j)),    # coeff K-tile
                      pl.BlockSpec((1, tk), lambda i, j: (0, j))],   # bias K-tile
            out_specs=pl.BlockSpec((tb, tk), lambda i, j: (i, j)),   # lane-dense store
        ),
        compiler_params=pltpu.CompilerParams(
            dimension_semantics=("parallel", "parallel"),   # both axes megacore-shardable
            vmem_limit_bytes=_vmem_limit_bytes(tb, tk, V, out_itemsize)),
        cost_estimate=cost,
    )(x, coeff_pad, bias_pad)
    return out[:, :n_outputs].astype(jnp.float32)


@jax.jit
def _dense_forward(x2d, coeff_in, bias_row):
    # Fused XLA path: used for small problems (launch + K-padding overhead would
    # dominate a Pallas call) and as the numerical reference for the kernel.
    ang = jnp.dot(x2d.astype(jnp.float32), coeff_in,
                  precision=jax.lax.Precision.HIGHEST)
    return jnp.cos(ang + bias_row)


class TorchLayerPallas:
    """JAX/Pallas analogue of tequila's TorchLayer (forward pass only)."""

    # Below this many (batch x padded-output) elements the fused XLA path wins.
    _PALLAS_MIN_ELEMS = 1 << 18

    def __init__(self, n_input_vars, n_weight_vars, n_outputs, key, use_pallas="auto"):
        self._input_len = n_input_vars
        self._n_outputs = n_outputs
        self._use_pallas = use_pallas
        k_w, k_c = jax.random.split(key)
        # One scalar parameter per weight-variable, U(0, 2*pi)
        # (mirrors torch.nn.init.uniform(torch.Tensor(1), a=0.0, b=2*pi)).
        self.weights = jax.random.uniform(
            k_w, (n_weight_vars,), jnp.float32, 0.0, 2.0 * np.pi)
        # Synthetic "circuit structure": row v, column k = how strongly variable v
        # enters the rotation angle of output expectation k.
        self.coeff = jax.random.uniform(
            k_c, (n_input_vars + n_weight_vars, n_outputs), jnp.float32, -1.0, 1.0)

        # Lane-dense (multiple of 128) zero-padded input-variable coefficients.
        # Kept in f32: no bf16 quantization of the true TorchLayer semantics.
        self._k_pad = _round_up(max(n_outputs, 1), 128)
        pad_k = self._k_pad - n_outputs
        self._coeff_in = self.coeff[:n_input_vars]                      # (V, K) f32
        self._coeff_in_pad = jnp.pad(self._coeff_in, ((0, 0), (0, pad_k)))
        self._coeff_w = self.coeff[n_input_vars:]                       # (n_weights, K) f32
        self._bias_pad = None
        self._bias_row = None
        self._refresh_bias()      # cached; recomputed only when weights change

    def _refresh_bias(self):
        # Weight contribution to every output angle, folded into a cached (1, K_pad)
        # bias (replaces broadcasting weights across the batch + concatenating).
        b = jnp.sum(self.weights[:, None] * self._coeff_w, axis=0)          # (K,)
        self._bias_pad = jnp.pad(b, (0, self._k_pad - self._n_outputs))[None, :]
        self._bias_row = self._bias_pad[:, :self._n_outputs]                # (1, K)

    def set_weights(self, new_weights):
        self.weights = jnp.asarray(new_weights, jnp.float32)
        self._refresh_bias()

    def _dense(self, x2d):
        return _dense_forward(x2d, self._coeff_in, self._bias_row)

    def __call__(self, x=None):
        if x is None:
            if self._input_len != 0:
                raise ValueError("Objective expects inputs but got None.")
            # all-weights objective: trivial closed form, no kernel needed
            return jnp.cos(self._bias_row[0])
        x = jnp.asarray(x)
        if x.ndim == 1:
            if x.shape[0] != self._input_len:
                raise ValueError(
                    "Received input of len {} when Objective takes {} inputs."
                    .format(x.shape[0], self._input_len))
            # single sample: pallas_call launch overhead dwarfs the compute
            return self._dense(x[None, :])[0]
        if x.ndim != 2:
            raise ValueError(
                "TorchLayer forward expects a 1-D or 2-D input, got ndim={}."
                .format(x.ndim))
        if x.shape[-1] != self._input_len:
            raise ValueError(
                "Received input of len {} when Objective takes {} inputs."
                .format(x.shape[-1], self._input_len))
        use_pallas = self._use_pallas
        if use_pallas == "auto":
            use_pallas = x.shape[0] * self._k_pad >= self._PALLAS_MIN_ELEMS
        if (not use_pallas) or self._input_len == 0:
            return self._dense(x)
        return tequila_objective_pallas(
            x, self._coeff_in_pad, self._bias_pad, n_outputs=self._n_outputs)


if __name__ == "__main__":
    key = jax.random.PRNGKey(0)
    k_x, k_x2, k_layer = jax.random.split(key, 3)

    batch, n_inputs, n_weights, n_outputs = 16, 4, 3, 8

    # Force the Pallas path: the "auto" heuristic would (correctly) route a
    # problem this small to the fused XLA path, but we want to exercise the kernel.
    layer = TorchLayerPallas(n_inputs, n_weights, n_outputs, k_layer, use_pallas=True)
    x = jax.random.uniform(k_x, (batch, n_inputs), jnp.float32, 0.0, 2.0 * np.pi)

    # Batched path -> Pallas kernel.
    out = jax.block_until_ready(layer(x))                       # (batch, n_outputs)
    ref = jax.block_until_ready(layer._dense(x))
    np.testing.assert_allclose(np.asarray(out), np.asarray(ref), rtol=1e-4, atol=1e-4)

    # Multi-step grid with a partial trailing batch block (B=200, forced tb=64).
    x2 = jax.random.uniform(k_x2, (200, n_inputs), jnp.float32, 0.0, 2.0 * np.pi)
    out2 = jax.block_until_ready(tequila_objective_pallas(
        x2, layer._coeff_in_pad, layer._bias_pad, n_outputs=n_outputs, max_tb=64))
    ref2 = jax.block_until_ready(layer._dense(x2))
    np.testing.assert_allclose(np.asarray(out2), np.asarray(ref2), rtol=1e-4, atol=1e-4)

    # 1-D (single-sample) path, like TorchLayer.forward on a 1-D tensor.
    out1 = jax.block_until_ready(layer(x[0]))
    np.testing.assert_allclose(np.asarray(out1), np.asarray(ref[0]), rtol=1e-4, atol=1e-4)

    # x = None path (all variables are weights).
    layer0 = TorchLayerPallas(0, n_weights, n_outputs, k_layer)
    out0 = jax.block_until_ready(layer0(None))
    assert out0.shape == (n_outputs,)

    print("KERNEL_OK")
</pallas_src>

<mosaic_0001>
module attributes {stable_mosaic.version = 11 : i64} {
  func.func @_objective_kernel(%arg0: i32, %arg1: i32, %arg2: memref<16x4xf32, #tpu.memory_space<vmem>>, %arg3: memref<4x128xf32, #tpu.memory_space<vmem>>, %arg4: memref<1x128xf32, #tpu.memory_space<vmem>>, %arg5: memref<16x128xf32, #tpu.memory_space<vmem>>) attributes {dimension_semantics = [#tpu.dimension_semantics<parallel>, #tpu.dimension_semantics<parallel>], iteration_bounds = array<i64: 1, 1>, scalar_prefetch = 0 : i64, scratch_operands = 0 : i64, tpu.core_type = #tpu.core_type<tc>, window_params = [{transform_indices = @transform_0, window_bounds = array<i64: 16, 4>}, {transform_indices = @transform_1, window_bounds = array<i64: 4, 128>}, {transform_indices = @transform_2, window_bounds = array<i64: 1, 128>}, {transform_indices = @transform_3, window_bounds = array<i64: 16, 128>}]} {
    %c0 = arith.constant 0 : index
    %c0_0 = arith.constant 0 : index
    %0 = vector.load %arg2[%c0, %c0_0] : memref<16x4xf32, #tpu.memory_space<vmem>>, vector<16x4xf32>
    %c0_1 = arith.constant 0 : index
    %c0_2 = arith.constant 0 : index
    %1 = vector.load %arg3[%c0_1, %c0_2] : memref<4x128xf32, #tpu.memory_space<vmem>>, vector<4x128xf32>
    %cst = arith.constant 0.000000e+00 : f32
    %2 = vector.broadcast %cst : f32 to vector<16x128xf32>
    %3 = vector.extract_strided_slice %0 {offsets = [0, 0], sizes = [16, 1], strides = [1, 1]} : vector<16x4xf32> to vector<16x1xf32>
    %4 = vector.extract_strided_slice %1 {offsets = [0, 0], sizes = [1, 128], strides = [1, 1]} : vector<4x128xf32> to vector<1x128xf32>
    %5 = vector.broadcast %3 : vector<16x1xf32> to vector<16x128xf32>
    %6 = vector.broadcast %4 : vector<1x128xf32> to vector<16x128xf32>
    %7 = arith.mulf %5, %6 : vector<16x128xf32>
    %8 = arith.addf %2, %7 : vector<16x128xf32>
    %9 = vector.extract_strided_slice %0 {offsets = [0, 1], sizes = [16, 1], strides = [1, 1]} : vector<16x4xf32> to vector<16x1xf32>
    %10 = vector.extract_strided_slice %1 {offsets = [1, 0], sizes = [1, 128], strides = [1, 1]} : vector<4x128xf32> to vector<1x128xf32>
    %11 = vector.broadcast %9 : vector<16x1xf32> to vector<16x128xf32>
    %12 = vector.broadcast %10 : vector<1x128xf32> to vector<16x128xf32>
    %13 = arith.mulf %11, %12 : vector<16x128xf32>
    %14 = arith.addf %8, %13 : vector<16x128xf32>
    %15 = vector.extract_strided_slice %0 {offsets = [0, 2], sizes = [16, 1], strides = [1, 1]} : vector<16x4xf32> to vector<16x1xf32>
    %16 = vector.extract_strided_slice %1 {offsets = [2, 0], sizes = [1, 128], strides = [1, 1]} : vector<4x128xf32> to vector<1x128xf32>
    %17 = vector.broadcast %15 : vector<16x1xf32> to vector<16x128xf32>
    %18 = vector.broadcast %16 : vector<1x128xf32> to vector<16x128xf32>
    %19 = arith.mulf %17, %18 : vector<16x128xf32>
    %20 = arith.addf %14, %19 : vector<16x128xf32>
    %21 = vector.extract_strided_slice %0 {offsets = [0, 3], sizes = [16, 1], strides = [1, 1]} : vector<16x4xf32> to vector<16x1xf32>
    %22 = vector.extract_strided_slice %1 {offsets = [3, 0], sizes = [1, 128], strides = [1, 1]} : vector<4x128xf32> to vector<1x128xf32>
    %23 = vector.broadcast %21 : vector<16x1xf32> to vector<16x128xf32>
    %24 = vector.broadcast %22 : vector<1x128xf32> to vector<16x128xf32>
    %25 = arith.mulf %23, %24 : vector<16x128xf32>
    %26 = arith.addf %20, %25 : vector<16x128xf32>
    %c0_3 = arith.constant 0 : index
    %c0_4 = arith.constant 0 : index
    %27 = vector.load %arg4[%c0_3, %c0_4] : memref<1x128xf32, #tpu.memory_space<vmem>>, vector<1x128xf32>
    %28 = vector.broadcast %27 : vector<1x128xf32> to vector<16x128xf32>
    %29 = arith.addf %26, %28 : vector<16x128xf32>
    %30 = math.cos %29 : vector<16x128xf32>
    %c0_5 = arith.constant 0 : index
    %c0_6 = arith.constant 0 : index
    %31 = vector.load %arg5[%c0_5, %c0_6] : memref<16x128xf32, #tpu.memory_space<vmem>>, vector<16x128xf32>
    tpu.vector_store %arg5[%c0_5, %c0_6], %30 {strides = array<i32>} : memref<16x128xf32, #tpu.memory_space<vmem>>, vector<16x128xf32>,
    return
  }
  func.func @transform_0(%arg0: i32, %arg1: i32) -> (i32, i32) {
    %c0_i32 = arith.constant 0 : i32
    %c0_i32_0 = arith.constant 0 : i32
    return %arg0, %c0_i32 : i32, i32
  }
  func.func @transform_1(%arg0: i32, %arg1: i32) -> (i32, i32) {
    %c0_i32 = arith.constant 0 : i32
    %c0_i32_0 = arith.constant 0 : i32
    return %c0_i32, %arg1 : i32, i32
  }
  func.func @transform_2(%arg0: i32, %arg1: i32) -> (i32, i32) {
    %c0_i32 = arith.constant 0 : i32
    %c0_i32_0 = arith.constant 0 : i32
    return %c0_i32, %arg1 : i32, i32
  }
  func.func @transform_3(%arg0: i32, %arg1: i32) -> (i32, i32) {
    %c0_i32 = arith.constant 0 : i32
    return %arg0, %arg1 : i32, i32
  }
}

</mosaic_0001>

<llo_original>
// kernel: tequila_objective_pallas.1
$region0: #{tequila_objective_pallas.1}
  #allocation0 [shape = 'u32[]', space=smem, size = 0x4, offset = 0x4, fixed_abs, tag = 'smem constant byte address 0x4 - core index']
  #allocation1 [shape = 'u32[144,128]{1,0:T(1,128)}', space=vmem, size = 0x12000, scoped, tag = 'internal scratch']
  %s0 = inlined_call_operand.vmem [shape: f32[16,4], index: 0, kind: input, shape index: {}]
  %s1 = inlined_call_operand.vmem [shape: f32[4,128], index: 1, kind: input, shape index: {}]
  %s2 = inlined_call_operand.vmem [shape: f32[1,128], index: 2, kind: input, shape index: {}]
  %s3 = inlined_call_operand.vmem [shape: f32[16,128], index: 3, kind: output, shape index: {}]
  %s4 = sld [smem:[#allocation0]]
  $region22: #{tequila_objective_pallas.1} parent=0
    _
  %s6 = ssub.s32 1, %s4
  %s7 = scalar_select 0, %s6, %s4
  // Predicated region
  $region2: #{tequila_objective_pallas.1} parent=0 // pred_check
    _
  $region3: #{tequila_objective_pallas.1} parent=0 // pred_check_branch
    %9 = sbr.rel (0) target = $region5
  $region4: #{tequila_objective_pallas.1} parent=0 // pred_region
    _
  $region5: #{tequila_objective_pallas.1} parent=0 // pred_fallthru
    _
  // Predicated region
  $region6: #{tequila_objective_pallas.1} parent=0 // pred_check
    _
  $region7: #{tequila_objective_pallas.1} parent=0 // pred_check_branch
    %11 = sbr.rel (0) target = $region9
  $region8: #{tequila_objective_pallas.1} parent=0 // pred_region
    _
  $region9: #{tequila_objective_pallas.1} parent=0 // pred_fallthru
    _
  // Predicated region
  $region10: #{tequila_objective_pallas.1} parent=0 // pred_check
    _
  $region11: #{tequila_objective_pallas.1} parent=0 // pred_check_branch
    %13 = sbr.rel (0) target = $region13
  $region12: #{tequila_objective_pallas.1} parent=0 // pred_region
    _
  $region13: #{tequila_objective_pallas.1} parent=0 // pred_fallthru
    _
  %v14 = vld [vmem:[%s0] sm:$0xff]
  %v15 = vld [vmem:[%s0 + $0x8] sm:$0xff]
  %v16 = vld [vmem:[%s1] sm:$0xf]
  %18 = vset.pattern.permute.xlu0 0
  %19 = vperm.xlu0 %18, %v14
  %v20 = vpop.permute.xlu0 %19
  %23 = vset.pattern.permute.xlu0 0
  %24 = vperm.xlu0 %23, %v15
  %v25 = vpop.permute.xlu0 %24
  %v27 = vlaneseq
  %v28 = vshrl.u32 %v27, 7
  %v29 = vsub.s32 0, %v28
  %v30 = vrot.slane %v16, %v29
  %v31 = vmul.f32 %v20, %v30
  %v32 = vmul.f32 %v25, %v30
  %v33 = vadd.f32 %v31, 0.0
  %v34 = vadd.f32 %v32, 0.0
  %35 = vset.pattern.permute.xlu0 1
  %36 = vperm.xlu0 %35, %v14
  %v37 = vpop.permute.xlu0 %36
  %39 = vset.pattern.permute.xlu0 1
  %40 = vperm.xlu0 %39, %v15
  %v41 = vpop.permute.xlu0 %40
  %v43 = vlaneseq
  %v44 = vshrl.u32 %v43, 7
  %v45 = vsub.s32 1, %v44
  %v46 = vrot.slane %v16, %v45
  %v47 = vmul.f32 %v37, %v46
  %v48 = vmul.f32 %v41, %v46
  %v49 = vadd.f32 %v33, %v47
  %v50 = vadd.f32 %v34, %v48
  %51 = vset.pattern.permute.xlu0 2
  %52 = vperm.xlu0 %51, %v14
  %v53 = vpop.permute.xlu0 %52
  %55 = vset.pattern.permute.xlu0 2
  %56 = vperm.xlu0 %55, %v15
  %v57 = vpop.permute.xlu0 %56
  %v59 = vlaneseq
  %v60 = vshrl.u32 %v59, 7
  %v61 = vsub.s32 2, %v60
  %v62 = vrot.slane %v16, %v61
  %v63 = vmul.f32 %v53, %v62
  %v64 = vmul.f32 %v57, %v62
  %v65 = vadd.f32 %v49, %v63
  %v66 = vadd.f32 %v50, %v64
  %67 = vset.pattern.permute.xlu0 3
  %68 = vperm.xlu0 %67, %v14
  %v69 = vpop.permute.xlu0 %68
  %71 = vset.pattern.permute.xlu0 3
  %72 = vperm.xlu0 %71, %v15
  %v73 = vpop.permute.xlu0 %72
  %v75 = vlaneseq
  %v76 = vshrl.u32 %v75, 7
  %v77 = vsub.s32 3, %v76
  %v78 = vrot.slane %v16, %v77
  %v79 = vmul.f32 %v69, %v78
  %v80 = vmul.f32 %v73, %v78
  %v81 = vadd.f32 %v65, %v79
  %v82 = vadd.f32 %v66, %v80
  %v83 = vld [vmem:[%s2] sm:$0x1]
  %v85 = vlaneseq
  %v86 = vshrl.u32 %v85, 7
  %v87 = vsub.s32 0, %v86
  %v88 = vrot.slane %v83, %v87
  %v90 = vadd.f32 %v81, %v88
  %v91 = vadd.f32 %v82, %v88
  %v92 = vand.u32 2147483647, %v90
  %vm93 = vcmp.le.f32.partialorder %v92, 0.7853982
  %vm94 = vcmp.lt.s32.totalorder %v90, 0
  %v95 = vand.u32 %v90, 2139095040
  %v96 = vshrl.u32 %v95, 23
  %v97 = vsub.s32 %v96, 127
  %v98 = vand.u32 2147483647, %v90
  %v99 = vand.u32 %v98, 8388607
  %v100 = vor.u32 %v99, 8388608
  %v101 = vsub.s32 0, %v100
  %v102 = vadd.s32 %v97, 1
  %vm103 = vcmp.gt.s32.totalorder %v102, 0
  %v104 = vsel %vm103, %v102, 0
  %v105 = vshrl.u32 %v104, 5
  %v106 = vand.u32 %v104, 31
  %v107 = vsub.s32 32, %v106
  %v108 = vshrl.u32 683565275, %v107
  %v109 = vshll.u32 683565275, %v106
  %v110 = vshrl.u32 2475754826, %v107
  %v111 = vor.u32 %v109, %v110
  %v112 = vshll.u32 2475754826, %v106
  %v113 = vshrl.u32 2131351028, %v107
  %v114 = vor.u32 %v112, %v113
  %v115 = vshll.u32 2131351028, %v106
  %v116 = vshrl.u32 2102212464, %v107
  %v117 = vor.u32 %v115, %v116
  %v118 = vshll.u32 2102212464, %v106
  %v119 = vshrl.u32 920167782, %v107
  %v120 = vor.u32 %v118, %v119
  %v121 = vshll.u32 920167782, %v106
  %v122 = vshrl.u32 1326507024, %v107
  %v123 = vor.u32 %v121, %v122
  %vm124 = vcmp.lt.s32.totalorder %v105, 1
  %vm125 = vcmp.lt.s32.totalorder %v105, 2
  %vm126 = vcmp.lt.s32.totalorder %v105, 3
  %vm127 = vcmp.lt.s32.totalorder %v105, 4
  %v128 = vsel %vm124, %v108, %v111
  %v129 = vsel %vm127, %v117, 2102212464
  %v130 = vsel %vm126, %v114, %v129
  %v131 = vsel %vm125, %v128, %v130
  %v132 = vsel %vm124, %v111, %v114
  %v133 = vsel %vm127, %v120, 920167782
  %v134 = vsel %vm126, %v117, %v133
  %v135 = vsel %vm125, %v132, %v134
  %v136 = vsel %vm124, %v114, %v117
  %v137 = vsel %vm127, %v123, 1326507024
  %v138 = vsel %vm126, %v120, %v137
  %v139 = vsel %vm125, %v136, %v138
  %v140 = vshll.u32 %v100, 8
  %v141 = vmul.u32.u64.compose %v140, %v139
  %v142 = vextract.low.u32 %v141
  %v143 = vextract.high.u32 %v141
  %v144 = vmul.u32.u64.compose %v140, %v135
  %v145 = vextract.low.u32 %v144
  %v146 = vextract.high.u32 %v144
  %v147 = vmul.u32 %v140, %v131
  %v148 = vadd.s32 %v143, %v145
  %vm149 = vc.u32 %v143, %v145
  %v150 = vadd.s32 %v146, 1
  %v151 = vsel %vm149, %v150, %v146
  %v152 = vadd.s32 %v147, %v151
  %v153 = vadd.s32 %v152, 536870912
  %v154 = vshrl.u32 %v153, 30
  %v155 = vshll.u32 %v154, 30
  %v156 = vsub.s32 %v152, %v155
  %vm157 = vcmp.lt.s32.totalorder %v156, 0
  %v158 = vsub.s32 0, %v156
  %v159 = vsel %vm157, %v158, %v156
  %v160 = vclz %v159
  %v161 = vsub.s32 %v160, 2
  %vm162 = vcmp.gt.s32.totalorder 0, %v161
  %v163 = vsel %vm162, 0, %v161
  %v164 = vsub.s32 32, %v163
  %v165 = vshll.u32 %v156, %v163
  %v166 = vshrl.u32 %v148, %v164
  %v167 = vor.u32 %v165, %v166
  %v168 = vsub.s32 4294967266, %v163
  %v169 = vadd.s32 %v168, 127
  %v170 = vshll.u32 %v169, 23
  %v171 = vor.u32 4788187, %v170
  %v172 = vand.u32 2147483647, %v171
  %v174 = vcvt.s32.f32 %v167
  %v175 = vmul.f32 %v174, %v172
  %v176 = vxor.u32 %v175, 2147483648
  %v177 = vsel %vm94, %v176, %v175
  %v178 = vsub.s32 4, %v154
  %v179 = vsel %vm94, %v178, %v154
  %v180 = vsel %vm93, %v90, %v177
  %v181 = vsel %vm93, 0, %v179
  %v182 = vcosq.f32.pop %v180
  %v183 = vsinq.f32.pop %v180
  %vm184 = vweird.f32 %v90
  %v185 = vand.u32 %v181, 3
  %vm186 = vcmp.lt.s32.totalorder %v185, 2
  %vm187 = vcmp.eq.s32.totalorder %v185, 0
  %v188 = vxor.u32 %v183, 2147483648
  %v189 = vsel %vm187, %v182, %v188
  %vm190 = vcmp.eq.s32.totalorder %v185, 2
  %v191 = vxor.u32 %v182, 2147483648
  %v192 = vsel %vm190, %v191, %v183
  %v193 = vsel %vm186, %v189, %v192
  %v194 = vsel %vm184, nan, %v193
  %v195 = vand.u32 2147483647, %v91
  %vm196 = vcmp.le.f32.partialorder %v195, 0.7853982
  %vm197 = vcmp.lt.s32.totalorder %v91, 0
  %v198 = vand.u32 %v91, 2139095040
  %v199 = vshrl.u32 %v198, 23
  %v200 = vsub.s32 %v199, 127
  %v201 = vand.u32 2147483647, %v91
  %v202 = vand.u32 %v201, 8388607
  %v203 = vor.u32 %v202, 8388608
  %v204 = vsub.s32 0, %v203
  %v205 = vadd.s32 %v200, 1
  %vm206 = vcmp.gt.s32.totalorder %v205, 0
  %v207 = vsel %vm206, %v205, 0
  %v208 = vshrl.u32 %v207, 5
  %v209 = vand.u32 %v207, 31
  %v210 = vsub.s32 32, %v209
  %v211 = vshrl.u32 683565275, %v210
  %v212 = vshll.u32 683565275, %v209
  %v213 = vshrl.u32 2475754826, %v210
  %v214 = vor.u32 %v212, %v213
  %v215 = vshll.u32 2475754826, %v209
  %v216 = vshrl.u32 2131351028, %v210
  %v217 = vor.u32 %v215, %v216
  %v218 = vshll.u32 2131351028, %v209
  %v219 = vshrl.u32 2102212464, %v210
  %v220 = vor.u32 %v218, %v219
  %v221 = vshll.u32 2102212464, %v209
  %v222 = vshrl.u32 920167782, %v210
  %v223 = vor.u32 %v221, %v222
  %v224 = vshll.u32 920167782, %v209
  %v225 = vshrl.u32 1326507024, %v210
  %v226 = vor.u32 %v224, %v225
  %vm227 = vcmp.lt.s32.totalorder %v208, 1
  %vm228 = vcmp.lt.s32.totalorder %v208, 2
  %vm229 = vcmp.lt.s32.totalorder %v208, 3
  %vm230 = vcmp.lt.s32.totalorder %v208, 4
  %v231 = vsel %vm227, %v211, %v214
  %v232 = vsel %vm230, %v220, 2102212464
  %v233 = vsel %vm229, %v217, %v232
  %v234 = vsel %vm228, %v231, %v233
  %v235 = vsel %vm227, %v214, %v217
  %v236 = vsel %vm230, %v223, 920167782
  %v237 = vsel %vm229, %v220, %v236
  %v238 = vsel %vm228, %v235, %v237
  %v239 = vsel %vm227, %v217, %v220
  %v240 = vsel %vm230, %v226, 1326507024
  %v241 = vsel %vm229, %v223, %v240
  %v242 = vsel %vm228, %v239, %v241
  %v243 = vshll.u32 %v203, 8
  %v244 = vmul.u32.u64.compose %v243, %v242
  %v245 = vextract.low.u32 %v244
  %v246 = vextract.high.u32 %v244
  %v247 = vmul.u32.u64.compose %v243, %v238
  %v248 = vextract.low.u32 %v247
  %v249 = vextract.high.u32 %v247
  %v250 = vmul.u32 %v243, %v234
  %v251 = vadd.s32 %v246, %v248
  %vm252 = vc.u32 %v246, %v248
  %v253 = vadd.s32 %v249, 1
  %v254 = vsel %vm252, %v253, %v249
  %v255 = vadd.s32 %v250, %v254
  %v256 = vadd.s32 %v255, 536870912
  %v257 = vshrl.u32 %v256, 30
  %v258 = vshll.u32 %v257, 30
  %v259 = vsub.s32 %v255, %v258
  %vm260 = vcmp.lt.s32.totalorder %v259, 0
  %v261 = vsub.s32 0, %v259
  %v262 = vsel %vm260, %v261, %v259
  %v263 = vclz %v262
  %v264 = vsub.s32 %v263, 2
  %vm265 = vcmp.gt.s32.totalorder 0, %v264
  %v266 = vsel %vm265, 0, %v264
  %v267 = vsub.s32 32, %v266
  %v268 = vshll.u32 %v259, %v266
  %v269 = vshrl.u32 %v251, %v267
  %v270 = vor.u32 %v268, %v269
  %v271 = vsub.s32 4294967266, %v266
  %v272 = vadd.s32 %v271, 127
  %v273 = vshll.u32 %v272, 23
  %v274 = vor.u32 4788187, %v273
  %v275 = vand.u32 2147483647, %v274
  %v277 = vcvt.s32.f32 %v270
  %v278 = vmul.f32 %v277, %v275
  %v279 = vxor.u32 %v278, 2147483648
  %v280 = vsel %vm197, %v279, %v278
  %v281 = vsub.s32 4, %v257
  %v282 = vsel %vm197, %v281, %v257
  %v283 = vsel %vm196, %v91, %v280
  %v284 = vsel %vm196, 0, %v282
  %v285 = vcosq.f32.pop %v283
  %v286 = vsinq.f32.pop %v283
  %vm287 = vweird.f32 %v91
  %v288 = vand.u32 %v284, 3
  %vm289 = vcmp.lt.s32.totalorder %v288, 2
  %vm290 = vcmp.eq.s32.totalorder %v288, 0
  %v291 = vxor.u32 %v286, 2147483648
  %v292 = vsel %vm290, %v285, %v291
  %vm293 = vcmp.eq.s32.totalorder %v288, 2
  %v294 = vxor.u32 %v285, 2147483648
  %v295 = vsel %vm293, %v294, %v286
  %v296 = vsel %vm289, %v292, %v295
  %v297 = vsel %vm287, nan, %v296
  %298 = vst [vmem:[%s3] sm:$0xff] %v194
  %299 = vst [vmem:[%s3 + $0x8] sm:$0xff] %v297
  // Predicated region
  $region14: #{tequila_objective_pallas.1} parent=0 // pred_check
    _
  $region15: #{tequila_objective_pallas.1} parent=0 // pred_check_branch
    %301 = sbr.rel (0) target = $region17
  $region16: #{tequila_objective_pallas.1} parent=0 // pred_region
    _
  $region17: #{tequila_objective_pallas.1} parent=0 // pred_fallthru
    _
  // Predicated region
  $region18: #{tequila_objective_pallas.1} parent=0 // pred_check
    _
  $region19: #{tequila_objective_pallas.1} parent=0 // pred_check_branch
    %303 = sbr.rel (0) target = $region21
  $region20: #{tequila_objective_pallas.1} parent=0 // pred_region
    _
  $region21: #{tequila_objective_pallas.1} parent=0 // pred_fallthru
    _

</llo_original>
